<compile_context>
chip_gen: v7x
topology: tpu7x:2x2x1
jax: 0.10.0
libtpu: 0.0.40
codegen_flags: <defaults>
</compile_context>

<pallas_src>
import functools

import jax
import jax.numpy as jnp
from jax.experimental import pallas as pl
from jax.experimental.pallas import tpu as pltpu

EPS = 1e-5


# ---------------------------------------------------------------------------
# Kernel 1: tiled BatchNorm statistics -> per-channel scale/shift.
# Single pass: accumulate sum and sum-of-squares per channel across row tiles,
# finalize scale = gamma * rsqrt(var + eps), shift = beta - mean * scale.
# ---------------------------------------------------------------------------
def bn_stats_kernel(x_ref, gamma_ref, beta_ref, scale_ref, shift_ref,
                    sum_ref, ssq_ref, *, m_total):
    i = pl.program_id(0)

    @pl.when(i == 0)
    def _():
        sum_ref[...] = jnp.zeros_like(sum_ref)
        ssq_ref[...] = jnp.zeros_like(ssq_ref)

    x = x_ref[...]                                        # (TM, C)
    sum_ref[...] += jnp.sum(x, axis=0, keepdims=True)     # (1, C)
    ssq_ref[...] += jnp.sum(x * x, axis=0, keepdims=True) # (1, C)

    @pl.when(i == pl.num_programs(0) - 1)
    def _():
        inv_m = 1.0 / float(m_total)
        mean = sum_ref[...] * inv_m
        var = ssq_ref[...] * inv_m - mean * mean          # biased variance
        scale = gamma_ref[...] * jax.lax.rsqrt(var + EPS)
        scale_ref[...] = scale
        shift_ref[...] = beta_ref[...] - mean * scale


def _pick_row_tile(m, max_rows):
    """Largest divisor of m that is <= max_rows and a multiple of 8 (sublane)."""
    if m <= max_rows:
        return m
    for t in range(max_rows, 7, -1):
        if m % t == 0 and t % 8 == 0:
            return t
    return m   # fallback: single block


def bn_scale_shift(x_nhwc, gamma, beta, tile_rows=1024):
    N, H, W, C = x_nhwc.shape
    M = N * H * W
    x2d = x_nhwc.reshape(M, C)
    TM = _pick_row_tile(M, tile_rows)
    kernel = functools.partial(bn_stats_kernel, m_total=M)
    scale, shift = pl.pallas_call(
        kernel,
        out_shape=(jax.ShapeDtypeStruct((1, C), jnp.float32),
                   jax.ShapeDtypeStruct((1, C), jnp.float32)),
        grid=(M // TM,),
        in_specs=[
            pl.BlockSpec((TM, C), lambda i: (i, 0)),
            pl.BlockSpec((1, C), lambda i: (0, 0)),
            pl.BlockSpec((1, C), lambda i: (0, 0)),
        ],
        out_specs=(pl.BlockSpec((1, C), lambda i: (0, 0)),
                   pl.BlockSpec((1, C), lambda i: (0, 0))),
        scratch_shapes=[pltpu.VMEM((1, C), jnp.float32),
                        pltpu.VMEM((1, C), jnp.float32)],
        compiler_params=pltpu.CompilerParams(
            dimension_semantics=("arbitrary",)),   # reduction axis
    )(x2d, gamma.reshape(1, C), beta.reshape(1, C))
    return scale, shift


# ---------------------------------------------------------------------------
# Kernel 2: fused (scale/shift BN) + ReLU + zero-pad + 3x3 conv (bias=False).
# Grid over batch.  Each step:
#   - applies y = relu(x * scale + shift) to the input tile (VPU),
#   - writes y into the interior of a zero-bordered VMEM scratch (in-kernel pad),
#   - builds an im2col slab from 9 shifted taps and does ONE MXU matmul with
#     contraction depth 9*Cin against the (9*Cin, Cout) weight slab,
#   - stores the result as a lane-dense (Hout*Wout, Cout) 2D block.
# ---------------------------------------------------------------------------
def fused_bn_relu_conv3x3_kernel(x_ref, scale_ref, shift_ref, w_ref, o_ref,
                                 xp_ref, *, hout, wout, stride):
    _, H, W, Cin = x_ref.shape

    # Zero the padded scratch so the 1-pixel halo is zero (re-zeroed every step
    # so correctness does not depend on grid-step ordering / megacore sharding).
    xp_ref[...] = jnp.zeros_like(xp_ref)

    # Fused BatchNorm (precomputed per-channel scale/shift) + ReLU.
    x2 = x_ref[0].reshape(H * W, Cin)
    y2 = jnp.maximum(x2 * scale_ref[...] + shift_ref[...], 0.0)
    xp_ref[1:H + 1, 1:W + 1, :] = y2.reshape(H, W, Cin)
    xp = xp_ref[...]                                      # (H+2, W+2, Cin)

    # im2col: concatenate the 9 shifted taps along channels -> (Hout*Wout, 9*Cin).
    taps = []
    for kh in range(3):
        for kw in range(3):
            if stride == 1:
                # contiguous (unstrided) window slices
                taps.append(xp[kh:kh + hout, kw:kw + wout, :])
            else:
                # stride > 1 path: strided value slice (not exercised in the test)
                taps.append(jax.lax.slice(
                    xp, (kh, kw, 0),
                    (kh + stride * (hout - 1) + 1,
                     kw + stride * (wout - 1) + 1, Cin),
                    (stride, stride, 1)))
    patches = jnp.concatenate(taps, axis=-1).reshape(hout * wout, 9 * Cin)

    # Single deep-contraction MXU matmul, f32 accumulation.
    o_ref[0] = jnp.dot(patches, w_ref[...], preferred_element_type=jnp.float32)


def bn_relu_conv3x3(x_nhwc, scale, shift, w_hwio, stride=1):
    N, H, W, Cin = x_nhwc.shape
    Cout = w_hwio.shape[-1]
    Hout = (H + 2 - 3) // stride + 1
    Wout = (W + 2 - 3) // stride + 1
    # (3, 3, Cin, Cout) -> (9*Cin, Cout); row order (kh, kw, cin) matches the
    # in-kernel channel-concat order of the 9 taps.
    w2d = w_hwio.reshape(9 * Cin, Cout)
    kernel = functools.partial(fused_bn_relu_conv3x3_kernel,
                               hout=Hout, wout=Wout, stride=stride)
    out = pl.pallas_call(
        kernel,
        out_shape=jax.ShapeDtypeStruct((N, Hout * Wout, Cout), jnp.float32),
        grid=(N,),
        in_specs=[
            pl.BlockSpec((1, H, W, Cin), lambda n: (n, 0, 0, 0)),
            pl.BlockSpec((1, Cin), lambda n: (0, 0)),
            pl.BlockSpec((1, Cin), lambda n: (0, 0)),
            pl.BlockSpec((9 * Cin, Cout), lambda n: (0, 0)),
        ],
        out_specs=pl.BlockSpec((1, Hout * Wout, Cout), lambda n: (n, 0, 0)),
        scratch_shapes=[pltpu.VMEM((H + 2, W + 2, Cin), jnp.float32)],
        compiler_params=pltpu.CompilerParams(dimension_semantics=("parallel",)),
    )(x_nhwc, scale, shift, w2d)
    return out.reshape(N, Hout, Wout, Cout)


# ---------------------------------------------------------------------------
# BasicBlock forward (Pallas) + pure-JAX reference for validation.
# ---------------------------------------------------------------------------
def basic_block_forward(x_nchw, params, stride=1, bn_tile_rows=1024):
    x = jnp.transpose(x_nchw, (0, 2, 3, 1))                   # NCHW -> NHWC
    s1, b1 = bn_scale_shift(x, params["gamma1"], params["beta1"], bn_tile_rows)
    y = bn_relu_conv3x3(x, s1, b1, params["w1_hwio"], stride=stride)
    s2, b2 = bn_scale_shift(y, params["gamma2"], params["beta2"], bn_tile_rows)
    y = bn_relu_conv3x3(y, s2, b2, params["w2_hwio"], stride=1)
    return jnp.transpose(y, (0, 3, 1, 2))                     # NHWC -> NCHW


def basic_block_reference(x_nchw, params, stride=1):
    def bn_relu_ref(x, g, b):
        m = jnp.mean(x, axis=(0, 2, 3), keepdims=True)
        v = jnp.mean((x - m) ** 2, axis=(0, 2, 3), keepdims=True)
        y = (x - m) * jax.lax.rsqrt(v + EPS)
        y = y * g.reshape(1, -1, 1, 1) + b.reshape(1, -1, 1, 1)
        return jnp.maximum(y, 0.0)

    def conv_ref(x, w_oihw, s):
        return jax.lax.conv_general_dilated(
            x, w_oihw, (s, s), ((1, 1), (1, 1)),
            dimension_numbers=("NCHW", "OIHW", "NCHW"))

    y = conv_ref(bn_relu_ref(x_nchw, params["gamma1"], params["beta1"]),
                 params["w1_oihw"], stride)
    y = conv_ref(bn_relu_ref(y, params["gamma2"], params["beta2"]),
                 params["w2_oihw"], 1)
    return y


def init_params(key, in_planes, planes):
    k = jax.random.split(key, 6)
    w1 = jax.random.normal(k[0], (planes, in_planes, 3, 3), jnp.float32) * 0.2
    w2 = jax.random.normal(k[1], (planes, planes, 3, 3), jnp.float32) * 0.2
    gamma1 = 1.0 + 0.1 * jax.random.normal(k[2], (in_planes,), jnp.float32)
    beta1 = 0.1 * jax.random.normal(k[3], (in_planes,), jnp.float32)
    gamma2 = 1.0 + 0.1 * jax.random.normal(k[4], (planes,), jnp.float32)
    beta2 = 0.1 * jax.random.normal(k[5], (planes,), jnp.float32)
    return {
        "w1_oihw": w1, "w2_oihw": w2,
        "w1_hwio": jnp.transpose(w1, (2, 3, 1, 0)),   # OIHW -> HWIO
        "w2_hwio": jnp.transpose(w2, (2, 3, 1, 0)),
        "gamma1": gamma1, "beta1": beta1,
        "gamma2": gamma2, "beta2": beta2,
    }


if __name__ == "__main__":
    N, in_planes, planes, H, W = 2, 4, 8, 16, 16
    stride = 1

    key = jax.random.PRNGKey(0)
    kx, kp = jax.random.split(key)
    x = jax.random.normal(kx, (N, in_planes, H, W), jnp.float32)
    params = init_params(kp, in_planes, planes)

    # bn_tile_rows=128 exercises the multi-step tiled-accumulation stats path
    # (M = 512 rows -> 4 grid steps per BN).
    out = basic_block_forward(x, params, stride=stride, bn_tile_rows=128)
    out = jax.block_until_ready(out)

    ref = jax.block_until_ready(basic_block_reference(x, params, stride=stride))
    assert out.shape == ref.shape == (N, planes, H // stride, W // stride)
    assert jnp.allclose(out, ref, atol=1e-4, rtol=1e-4), (
        float(jnp.max(jnp.abs(out - ref))))

    print("KERNEL_OK")
</pallas_src>

<mosaic_0001>
module attributes {stable_mosaic.version = 11 : i64} {
  func.func @bn_stats_kernel(%arg0: i32, %arg1: memref<128x4xf32, #tpu.memory_space<vmem>>, %arg2: memref<1x4xf32, #tpu.memory_space<vmem>>, %arg3: memref<1x4xf32, #tpu.memory_space<vmem>>, %arg4: memref<1x4xf32, #tpu.memory_space<vmem>>, %arg5: memref<1x4xf32, #tpu.memory_space<vmem>>, %arg6: memref<1x4xf32, #tpu.memory_space<vmem>>, %arg7: memref<1x4xf32, #tpu.memory_space<vmem>>) attributes {dimension_semantics = [#tpu.dimension_semantics<arbitrary>], iteration_bounds = array<i64: 4>, scalar_prefetch = 0 : i64, scratch_operands = 2 : i64, tpu.core_type = #tpu.core_type<tc>, window_params = [{transform_indices = @transform_0, window_bounds = array<i64: 128, 4>}, {pipeline_mode = #tpu.pipeline_mode<synchronous>, transform_indices = @transform_1, window_bounds = array<i64: 1, 4>}, {pipeline_mode = #tpu.pipeline_mode<synchronous>, transform_indices = @transform_2, window_bounds = array<i64: 1, 4>}, {pipeline_mode = #tpu.pipeline_mode<synchronous>, transform_indices = @transform_3, window_bounds = array<i64: 1, 4>}, {pipeline_mode = #tpu.pipeline_mode<synchronous>, transform_indices = @transform_4, window_bounds = array<i64: 1, 4>}]} {
    %c0_i32 = arith.constant 0 : i32
    %0 = arith.cmpi eq, %arg0, %c0_i32 : i32
    %1 = arith.extui %0 : i1 to i32
    %c0_i32_0 = arith.constant 0 : i32
    %2 = arith.cmpi ne, %1, %c0_i32_0 : i32
    scf.if %2 {
      %cst_12 = arith.constant 0.000000e+00 : f32
      %18 = vector.broadcast %cst_12 : f32 to vector<1x4xf32>
      %c0_13 = arith.constant 0 : index
      %c0_14 = arith.constant 0 : index
      %19 = vector.load %arg6[%c0_13, %c0_14] : memref<1x4xf32, #tpu.memory_space<vmem>>, vector<1x4xf32>
      tpu.vector_store %arg6[%c0_13, %c0_14], %18 {strides = array<i32>} : memref<1x4xf32, #tpu.memory_space<vmem>>, vector<1x4xf32>,
      %cst_15 = arith.constant 0.000000e+00 : f32
      %20 = vector.broadcast %cst_15 : f32 to vector<1x4xf32>
      %c0_16 = arith.constant 0 : index
      %c0_17 = arith.constant 0 : index
      %21 = vector.load %arg7[%c0_16, %c0_17] : memref<1x4xf32, #tpu.memory_space<vmem>>, vector<1x4xf32>
      tpu.vector_store %arg7[%c0_16, %c0_17], %20 {strides = array<i32>} : memref<1x4xf32, #tpu.memory_space<vmem>>, vector<1x4xf32>,
    } else {
    }
    %c0 = arith.constant 0 : index
    %c0_1 = arith.constant 0 : index
    %3 = vector.load %arg1[%c0, %c0_1] : memref<128x4xf32, #tpu.memory_space<vmem>>, vector<128x4xf32>
    %c0_2 = arith.constant 0 : index
    %c0_3 = arith.constant 0 : index
    %4 = vector.load %arg6[%c0_2, %c0_3] : memref<1x4xf32, #tpu.memory_space<vmem>>, vector<1x4xf32>
    %cst = arith.constant dense<0.000000e+00> : vector<4xf32>
    %5 = vector.multi_reduction <add>, %3, %cst [0] : vector<128x4xf32> to vector<4xf32>
    %6 = vector.shape_cast %5 : vector<4xf32> to vector<1x4xf32>
    %7 = arith.addf %4, %6 : vector<1x4xf32>
    %c0_4 = arith.constant 0 : index
    %c0_5 = arith.constant 0 : index
    %8 = vector.load %arg6[%c0_4, %c0_5] : memref<1x4xf32, #tpu.memory_space<vmem>>, vector<1x4xf32>
    tpu.vector_store %arg6[%c0_4, %c0_5], %7 {strides = array<i32>} : memref<1x4xf32, #tpu.memory_space<vmem>>, vector<1x4xf32>,
    %c0_6 = arith.constant 0 : index
    %c0_7 = arith.constant 0 : index
    %9 = vector.load %arg7[%c0_6, %c0_7] : memref<1x4xf32, #tpu.memory_space<vmem>>, vector<1x4xf32>
    %10 = arith.mulf %3, %3 : vector<128x4xf32>
    %cst_8 = arith.constant dense<0.000000e+00> : vector<4xf32>
    %11 = vector.multi_reduction <add>, %10, %cst_8 [0] : vector<128x4xf32> to vector<4xf32>
    %12 = vector.shape_cast %11 : vector<4xf32> to vector<1x4xf32>
    %13 = arith.addf %9, %12 : vector<1x4xf32>
    %c0_9 = arith.constant 0 : index
    %c0_10 = arith.constant 0 : index
    %14 = vector.load %arg7[%c0_9, %c0_10] : memref<1x4xf32, #tpu.memory_space<vmem>>, vector<1x4xf32>
    tpu.vector_store %arg7[%c0_9, %c0_10], %13 {strides = array<i32>} : memref<1x4xf32, #tpu.memory_space<vmem>>, vector<1x4xf32>,
    %c3_i32 = arith.constant 3 : i32
    %15 = arith.cmpi eq, %arg0, %c3_i32 : i32
    %16 = arith.extui %15 : i1 to i32
    %c0_i32_11 = arith.constant 0 : i32
    %17 = arith.cmpi ne, %16, %c0_i32_11 : i32
    scf.if %17 {
      %c0_12 = arith.constant 0 : index
      %c0_13 = arith.constant 0 : index
      %18 = vector.load %arg6[%c0_12, %c0_13] : memref<1x4xf32, #tpu.memory_space<vmem>>, vector<1x4xf32>
      %cst_14 = arith.constant 0.001953125 : f32
      %19 = vector.broadcast %cst_14 : f32 to vector<1x4xf32>
      %20 = arith.mulf %18, %19 : vector<1x4xf32>
      %c0_15 = arith.constant 0 : index
      %c0_16 = arith.constant 0 : index
      %21 = vector.load %arg7[%c0_15, %c0_16] : memref<1x4xf32, #tpu.memory_space<vmem>>, vector<1x4xf32>
      %cst_17 = arith.constant 0.001953125 : f32
      %22 = vector.broadcast %cst_17 : f32 to vector<1x4xf32>
      %23 = arith.mulf %21, %22 : vector<1x4xf32>
      %24 = arith.mulf %20, %20 : vector<1x4xf32>
      %25 = arith.subf %23, %24 : vector<1x4xf32>
      %c0_18 = arith.constant 0 : index
      %c0_19 = arith.constant 0 : index
      %26 = vector.load %arg2[%c0_18, %c0_19] : memref<1x4xf32, #tpu.memory_space<vmem>>, vector<1x4xf32>
      %cst_20 = arith.constant 9.99999974E-6 : f32
      %27 = vector.broadcast %cst_20 : f32 to vector<1x4xf32>
      %28 = arith.addf %25, %27 : vector<1x4xf32>
      %29 = math.rsqrt %28 : vector<1x4xf32>
      %30 = arith.mulf %26, %29 : vector<1x4xf32>
      %c0_21 = arith.constant 0 : index
      %c0_22 = arith.constant 0 : index
      %31 = vector.load %arg4[%c0_21, %c0_22] : memref<1x4xf32, #tpu.memory_space<vmem>>, vector<1x4xf32>
      tpu.vector_store %arg4[%c0_21, %c0_22], %30 {strides = array<i32>} : memref<1x4xf32, #tpu.memory_space<vmem>>, vector<1x4xf32>,
      %c0_23 = arith.constant 0 : index
      %c0_24 = arith.constant 0 : index
      %32 = vector.load %arg3[%c0_23, %c0_24] : memref<1x4xf32, #tpu.memory_space<vmem>>, vector<1x4xf32>
      %33 = arith.mulf %20, %30 : vector<1x4xf32>
      %34 = arith.subf %32, %33 : vector<1x4xf32>
      %c0_25 = arith.constant 0 : index
      %c0_26 = arith.constant 0 : index
      %35 = vector.load %arg5[%c0_25, %c0_26] : memref<1x4xf32, #tpu.memory_space<vmem>>, vector<1x4xf32>
      tpu.vector_store %arg5[%c0_25, %c0_26], %34 {strides = array<i32>} : memref<1x4xf32, #tpu.memory_space<vmem>>, vector<1x4xf32>,
    } else {
    }
    return
  }
  func.func @transform_0(%arg0: i32) -> (i32, i32) {
    %c0_i32 = arith.constant 0 : i32
    %c0_i32_0 = arith.constant 0 : i32
    return %arg0, %c0_i32 : i32, i32
  }
  func.func @transform_1(%arg0: i32) -> (i32, i32) {
    %c0_i32 = arith.constant 0 : i32
    %c0_i32_0 = arith.constant 0 : i32
    %c0_i32_1 = arith.constant 0 : i32
    return %c0_i32, %c0_i32_0 : i32, i32
  }
  func.func @transform_2(%arg0: i32) -> (i32, i32) {
    %c0_i32 = arith.constant 0 : i32
    %c0_i32_0 = arith.constant 0 : i32
    %c0_i32_1 = arith.constant 0 : i32
    return %c0_i32, %c0_i32_0 : i32, i32
  }
  func.func @transform_3(%arg0: i32) -> (i32, i32) {
    %c0_i32 = arith.constant 0 : i32
    %c0_i32_0 = arith.constant 0 : i32
    %c0_i32_1 = arith.constant 0 : i32
    return %c0_i32, %c0_i32_0 : i32, i32
  }
  func.func @transform_4(%arg0: i32) -> (i32, i32) {
    %c0_i32 = arith.constant 0 : i32
    %c0_i32_0 = arith.constant 0 : i32
    %c0_i32_1 = arith.constant 0 : i32
    return %c0_i32, %c0_i32_0 : i32, i32
  }
}

</mosaic_0001>

<llo_original>
// kernel: tpu_custom_call.1
$region0: #{tpu_custom_call.1}
  #allocation0 [shape = 'u32[]', space=smem, size = 0x4, offset = 0x4, fixed_abs, tag = 'smem constant byte address 0x4 - core index']
  #allocation1 [shape = 'u32[144,128]{1,0:T(1,128)}', space=vmem, size = 0x12000, scoped, tag = 'internal scratch']
  #allocation2 [shape = 'f32[1,4]{1,0:T(1,128)}', space=vmem, size = 0x200, scoped, tag = 'scratch operand']
  #allocation3 [shape = 'f32[1,4]{1,0:T(1,128)}', space=vmem, size = 0x200, scoped, tag = 'scratch operand']
  %s0 = inlined_call_operand.vmem [shape: f32[512,4], index: 0, kind: input, shape index: {}]
  %s1 = inlined_call_operand.vmem [shape: f32[1,4], index: 1, kind: input, shape index: {}]
  %s2 = inlined_call_operand.vmem [shape: f32[1,4], index: 2, kind: input, shape index: {}]
  %s3 = inlined_call_operand.hbm [shape: f32[1,4], index: 3, kind: output, shape index: {0}]
  %s4 = inlined_call_operand.hbm [shape: f32[1,4], index: 4, kind: output, shape index: {1}]
  %5 = xla_tuple %s3, %s4
  %s6 = sld [smem:[#allocation0]]
  $region61: #{tpu_custom_call.1} parent=0
    _
  %s8 = ssub.s32 1, %s6
  %s9 = scalar_select 0, %s8, %s6
  $region1: #{tpu_custom_call.1} parent=0
    #allocation4 [shape = 'u8[512]{0}', space=vmem, size = 0x400, scoped, tag = 'output window, operand 0, single buffered']
    #allocation5 [shape = 's32[2]{0}', space=sflag, size = 0x8, scoped, tag = 'scoped memory for tpu_custom_call.1']
    #allocation6 [shape = 'u8[512]{0}', space=vmem, size = 0x400, scoped, tag = 'output window, operand 1, single buffered']
    #allocation7 [shape = 's32[1]{0}', space=sflag, size = 0x4, scoped, tag = 'scoped memory for tpu_custom_call.1']
    %10 = vsyncpa [#allocation5], 0
    %11 = vsyncpa [#allocation7], 0
    loop: start=0, step=1, limit=6
    $region2: #{tpu_custom_call.1} parent=1 // loop_pre_header
      _
    $region3: #{tpu_custom_call.1} parent=1 // loop_header
      %s13 = sphi 0, %s17
      %p14 = scmp.ge.s32.totalorder %s13, 6
      %s23 = sphi 0, %s25
      %s26 = sphi 0, %s23
      %s27 = sphi 0, %s26
      %s43 = sphi 0, %s27
      %s47 = sphi 0, %s47
      %s49 = sphi 0, %s47
      %s50 = sphi 0, %s49
      %s64 = sphi 0, %s50
      %s68 = sphi 0, %s68
      %s70 = sphi 0, %s68
      %s71 = sphi 0, %s70
      %s85 = sphi 0, %s71
      %s89 = sphi 0, %s89
      %s91 = sphi 0, %s89
      %s92 = sphi 0, %s91
      %s106 = sphi 0, %s92
      %s110 = sphi 0, %s110
      %s112 = sphi 0, %s110
      %s113 = sphi 0, %s112
      %s127 = sphi 0, %s113
    $region4: #{tpu_custom_call.1} parent=1 // loop_header_branch
      %16 = sbr.rel (%p14) target = $region8
    $region5: #{tpu_custom_call.1} parent=1 // loop_body
      %s18 = ssub.s32 %s13, 1
      %s19 = ssub.s32 %s13, 2
      %s20 = sadd.s32 %s13, 1
      %s21 = ssub.s32 %s13, %s20
      %p22 = scmp.eq.s32.totalorder %s21, 0
      %s24 = sadd.s32 %s23, 1
      %s25 = scalar_select %p22, %s23, %s24
      %p28 = pneg %p22
      %p29 = scmp.eq.s32.totalorder %s13, 3
      %p30 = por %p28, %p29
      %p31 = scmp.ne.s32.totalorder %s23, %s26
      %p32 = scmp.eq.s32.totalorder %s13, 0
      %p33 = por %p31, %p32
      %p34 = scmp.ne.s32.totalorder %s23, %s26
      %p35 = scmp.eq.s32.totalorder %s18, 3
      %p36 = por %p34, %p35
      %p37 = scmp.ne.s32.totalorder %s26, %s27
      %p38 = scmp.eq.s32.totalorder %s18, 0
      %p39 = por %p37, %p38
      %p40 = scmp.ne.s32.totalorder %s26, %s27
      %p41 = scmp.eq.s32.totalorder %s19, 3
      %p42 = por %p40, %p41
      %p44 = scmp.ne.s32.totalorder %s27, %s43
      %p45 = scmp.eq.s32.totalorder %s19, 0
      %p46 = por %p44, %p45
      %s48 = sadd.s32 %s47, 1
      %p51 = scmp.eq.s32.totalorder %s13, 3
      %p52 = scmp.ne.s32.totalorder %s47, %s49
      %p53 = scmp.eq.s32.totalorder %s13, 0
      %p54 = por %p52, %p53
      %p55 = scmp.ne.s32.totalorder %s47, %s49
      %p56 = scmp.eq.s32.totalorder %s18, 3
      %p57 = por %p55, %p56
      %p58 = scmp.ne.s32.totalorder %s49, %s50
      %p59 = scmp.eq.s32.totalorder %s18, 0
      %p60 = por %p58, %p59
      %p61 = scmp.ne.s32.totalorder %s49, %s50
      %p62 = scmp.eq.s32.totalorder %s19, 3
      %p63 = por %p61, %p62
      %p65 = scmp.ne.s32.totalorder %s50, %s64
      %p66 = scmp.eq.s32.totalorder %s19, 0
      %p67 = por %p65, %p66
      %s69 = sadd.s32 %s68, 1
      %p72 = scmp.eq.s32.totalorder %s13, 3
      %p73 = scmp.ne.s32.totalorder %s68, %s70
      %p74 = scmp.eq.s32.totalorder %s13, 0
      %p75 = por %p73, %p74
      %p76 = scmp.ne.s32.totalorder %s68, %s70
      %p77 = scmp.eq.s32.totalorder %s18, 3
      %p78 = por %p76, %p77
      %p79 = scmp.ne.s32.totalorder %s70, %s71
      %p80 = scmp.eq.s32.totalorder %s18, 0
      %p81 = por %p79, %p80
      %p82 = scmp.ne.s32.totalorder %s70, %s71
      %p83 = scmp.eq.s32.totalorder %s19, 3
      %p84 = por %p82, %p83
      %p86 = scmp.ne.s32.totalorder %s71, %s85
      %p87 = scmp.eq.s32.totalorder %s19, 0
      %p88 = por %p86, %p87
      %s90 = sadd.s32 %s89, 1
      %p93 = scmp.eq.s32.totalorder %s13, 3
      %p94 = scmp.ne.s32.totalorder %s89, %s91
      %p95 = scmp.eq.s32.totalorder %s13, 0
      %p96 = por %p94, %p95
      %p97 = scmp.ne.s32.totalorder %s89, %s91
      %p98 = scmp.eq.s32.totalorder %s18, 3
      %p99 = por %p97, %p98
      %p100 = scmp.ne.s32.totalorder %s91, %s92
      %p101 = scmp.eq.s32.totalorder %s18, 0
      %p102 = por %p100, %p101
      %p103 = scmp.ne.s32.totalorder %s91, %s92
      %p104 = scmp.eq.s32.totalorder %s19, 3
      %p105 = por %p103, %p104
      %p107 = scmp.ne.s32.totalorder %s92, %s106
      %p108 = scmp.eq.s32.totalorder %s19, 0
      %p109 = por %p107, %p108
      %s111 = sadd.s32 %s110, 1
      %p114 = scmp.eq.s32.totalorder %s13, 3
      %p115 = scmp.ne.s32.totalorder %s110, %s112
      %p116 = scmp.eq.s32.totalorder %s13, 0
      %p117 = por %p115, %p116
      %p118 = scmp.ne.s32.totalorder %s110, %s112
      %p119 = scmp.eq.s32.totalorder %s18, 3
      %p120 = por %p118, %p119
      %p121 = scmp.ne.s32.totalorder %s112, %s113
      %p122 = scmp.eq.s32.totalorder %s18, 0
      %p123 = por %p121, %p122
      %p124 = scmp.ne.s32.totalorder %s112, %s113
      %p125 = scmp.eq.s32.totalorder %s19, 3
      %p126 = por %p124, %p125
      %p128 = scmp.ne.s32.totalorder %s113, %s127
      %p129 = scmp.eq.s32.totalorder %s19, 0
      %p130 = por %p128, %p129
      %p131 = scmp.le.s32.totalorder 1, %s13
      %p132 = scmp.lt.s32.totalorder %s13, 5
      %p133 = pnand %p131, %p132
      %p134 = pneg %p133
      // Predicated region
      $region9: #{tpu_custom_call.1} parent=5 // pred_check
        _
      $region10: #{tpu_custom_call.1} parent=5 // pred_check_branch
        %136 = sbr.rel (%p133) target = $region12
      $region11: #{tpu_custom_call.1} parent=5 // pred_region
        %s137 = ssub.s32 %s13, 1
        // Predicated region
        $region13: #{tpu_custom_call.1} parent=11 // pred_check
          %p138 = pneg %p60
        $region14: #{tpu_custom_call.1} parent=11 // pred_check_branch
          %140 = sbr.rel (%p138) target = $region16
        $region15: #{tpu_custom_call.1} parent=11 // pred_region
          _
        $region16: #{tpu_custom_call.1} parent=11 // pred_fallthru
          _
        // Predicated region
        $region17: #{tpu_custom_call.1} parent=11 // pred_check
          %p141 = pneg %p81
        $region18: #{tpu_custom_call.1} parent=11 // pred_check_branch
          %143 = sbr.rel (%p141) target = $region20
        $region19: #{tpu_custom_call.1} parent=11 // pred_region
          _
        $region20: #{tpu_custom_call.1} parent=11 // pred_fallthru
          _
      $region12: #{tpu_custom_call.1} parent=5 // pred_fallthru
        _
      %p144 = scmp.lt.s32.totalorder %s13, 4
      // Predicated region
      $region21: #{tpu_custom_call.1} parent=5 // pred_check
        %p145 = pneg %p144
      $region22: #{tpu_custom_call.1} parent=5 // pred_check_branch
        %147 = sbr.rel (%p145) target = $region24
      $region23: #{tpu_custom_call.1} parent=5 // pred_region
        // Predicated region
        $region25: #{tpu_custom_call.1} parent=23 // pred_check
          %p148 = pneg %p33
        $region26: #{tpu_custom_call.1} parent=23 // pred_check_branch
          %150 = sbr.rel (%p148) target = $region28
        $region27: #{tpu_custom_call.1} parent=23 // pred_region
          %s151 = smul.u32 16, %s13
          %p152 = scmp.lt.s32.totalorder %s151, 63
          %s153 = scalar_select %p152, %s151, 63
          %s154 = smul.addr %s153, 8
          %s155 = scalar_lea.vmem %s0, %s154
          %s156 = smul.u32 16, %s13
        $region28: #{tpu_custom_call.1} parent=23 // pred_fallthru
          _
      $region24: #{tpu_custom_call.1} parent=5 // pred_fallthru
        _
      %p157 = scmp.le.s32.totalorder 1, %s13
      %p158 = scmp.lt.s32.totalorder %s13, 5
      %p159 = pnand %p157, %p158
      %p160 = pneg %p159
      // Predicated region
      $region29: #{tpu_custom_call.1} parent=5 // pred_check
        _
      $region30: #{tpu_custom_call.1} parent=5 // pred_check_branch
        %162 = sbr.rel (%p159) target = $region32
      $region31: #{tpu_custom_call.1} parent=5 // pred_region
        %s163 = ssub.s32 %s13, 1
        %s164 = smul.u32 16, %s18
        %p165 = scmp.lt.s32.totalorder %s164, 63
        %s166 = scalar_select %p165, %s164, 63
        %s167 = smul.addr %s166, 8
        %s168 = scalar_lea.vmem %s0, %s167
        %p169 = pneg %p39
        %p170 = pneg %p36
        %p171 = pneg %p60
        %p172 = pneg %p57
        %p173 = pneg %p81
        %p174 = pneg %p78
        %p175 = pneg %p102
        %p176 = pneg %p99
        %p177 = pneg %p123
        %p178 = pneg %p120
        %s179 = smul.u32 16, %s18
        %p180 = scmp.lt.s32.totalorder %s179, 63
        %s181 = scalar_select %p180, %s179, 63
        %s182 = smul.addr %s181, 8
        %s183 = scalar_lea.vmem %s0, %s182
        %s184 = smul.u32 16, %s18
        %p185 = scmp.eq.s32.totalorder %s18, 0
        // Predicated region
        $region33: #{tpu_custom_call.1} parent=31 // pred_check
          %p186 = pneg %p185
        $region34: #{tpu_custom_call.1} parent=31 // pred_check_branch
          %188 = sbr.rel (%p186) target = $region36
        $region35: #{tpu_custom_call.1} parent=31 // pred_region
          %vm189 = vcmask 24576
          %190 = vst.msk [vmem:[#allocation2] sm:$0x1] %vm189, 0.0
          %191 = vst.msk [vmem:[#allocation3] sm:$0x1] %vm189, 0.0
        $region36: #{tpu_custom_call.1} parent=31 // pred_fallthru
          _
        %v192 = vld [vmem:[%s183] sm:$0xff]
        %v193 = vld [vmem:[%s183 + $0x8] sm:$0xff]
        %v194 = vld [vmem:[%s183 + $0x10] sm:$0xff]
        %v195 = vld [vmem:[%s183 + $0x18] sm:$0xff]
        %v196 = vld [vmem:[%s183 + $0x20] sm:$0xff]
        %v197 = vld [vmem:[%s183 + $0x28] sm:$0xff]
        %v198 = vld [vmem:[%s183 + $0x30] sm:$0xff]
        %v199 = vld [vmem:[%s183 + $0x38] sm:$0xff]
        %v200 = vld [vmem:[%s183 + $0x40] sm:$0xff]
        %v201 = vld [vmem:[%s183 + $0x48] sm:$0xff]
        %v202 = vld [vmem:[%s183 + $0x50] sm:$0xff]
        %v203 = vld [vmem:[%s183 + $0x58] sm:$0xff]
        %v204 = vld [vmem:[%s183 + $0x60] sm:$0xff]
        %v205 = vld [vmem:[%s183 + $0x68] sm:$0xff]
        %v206 = vld [vmem:[%s183 + $0x70] sm:$0xff]
        %v207 = vld [vmem:[%s183 + $0x78] sm:$0xff]
        %v208 = vld [vmem:[#allocation2] sm:$0x1]
        %vm209 = vcmask 31744
        %v210 = vsel %vm209, %v192, 0.0
        %v211 = vsel %vm209, %v193, 0.0
        %v212 = vadd.f32 %v210, %v211
        %v213 = vsel %vm209, %v194, 0.0
        %v214 = vadd.f32 %v212, %v213
        %v215 = vsel %vm209, %v195, 0.0
        %v216 = vadd.f32 %v214, %v215
        %v217 = vsel %vm209, %v196, 0.0
        %v218 = vadd.f32 %v216, %v217
        %v219 = vsel %vm209, %v197, 0.0
        %v220 = vadd.f32 %v218, %v219
        %v221 = vsel %vm209, %v198, 0.0
        %v222 = vadd.f32 %v220, %v221
        %v223 = vsel %vm209, %v199, 0.0
        %v224 = vadd.f32 %v222, %v223
        %v225 = vsel %vm209, %v200, 0.0
        %v226 = vadd.f32 %v224, %v225
        %v227 = vsel %vm209, %v201, 0.0
        %v228 = vadd.f32 %v226, %v227
        %v229 = vsel %vm209, %v202, 0.0
        %v230 = vadd.f32 %v228, %v229
        %v231 = vsel %vm209, %v203, 0.0
        %v232 = vadd.f32 %v230, %v231
        %v233 = vsel %vm209, %v204, 0.0
        %v234 = vadd.f32 %v232, %v233
        %v235 = vsel %vm209, %v205, 0.0
        %v236 = vadd.f32 %v234, %v235
        %v237 = vsel %vm209, %v206, 0.0
        %v238 = vadd.f32 %v236, %v237
        %v239 = vsel %vm209, %v207, 0.0
        %v240 = vadd.f32 %v238, %v239
        %v241 = vrot.slane %v240, 4
        %v242 = vadd.f32 %v240, %v241
        %v243 = vrot.slane %v242, 2
        %v244 = vadd.f32 %v242, %v243
        %v245 = vrot.slane %v244, 1
        %v246 = vadd.f32 %v244, %v245
        %v247 = vadd.f32 %v208, %v246
        %vm248 = vcmask 24576
        %249 = vst.msk [vmem:[#allocation2] sm:$0x1] %vm248, %v247
        %v250 = vld [vmem:[#allocation3] sm:$0x1]
        %v251 = vmul.f32 %v192, %v192
        %v252 = vmul.f32 %v193, %v193
        %v253 = vmul.f32 %v194, %v194
        %v254 = vmul.f32 %v195, %v195
        %v255 = vmul.f32 %v196, %v196
        %v256 = vmul.f32 %v197, %v197
        %v257 = vmul.f32 %v198, %v198
        %v258 = vmul.f32 %v199, %v199
        %v259 = vmul.f32 %v200, %v200
        %v260 = vmul.f32 %v201, %v201
        %v261 = vmul.f32 %v202, %v202
        %v262 = vmul.f32 %v203, %v203
        %v263 = vmul.f32 %v204, %v204
        %v264 = vmul.f32 %v205, %v205
        %v265 = vmul.f32 %v206, %v206
        %v266 = vmul.f32 %v207, %v207
        %v267 = vsel %vm209, %v251, 0.0
        %v268 = vsel %vm209, %v252, 0.0
        %v269 = vadd.f32 %v267, %v268
        %v270 = vsel %vm209, %v253, 0.0
        %v271 = vadd.f32 %v269, %v270
        %v272 = vsel %vm209, %v254, 0.0
        %v273 = vadd.f32 %v271, %v272
        %v274 = vsel %vm209, %v255, 0.0
        %v275 = vadd.f32 %v273, %v274
        %v276 = vsel %vm209, %v256, 0.0
        %v277 = vadd.f32 %v275, %v276
        %v278 = vsel %vm209, %v257, 0.0
        %v279 = vadd.f32 %v277, %v278
        %v280 = vsel %vm209, %v258, 0.0
        %v281 = vadd.f32 %v279, %v280
        %v282 = vsel %vm209, %v259, 0.0
        %v283 = vadd.f32 %v281, %v282
        %v284 = vsel %vm209, %v260, 0.0
        %v285 = vadd.f32 %v283, %v284
        %v286 = vsel %vm209, %v261, 0.0
        %v287 = vadd.f32 %v285, %v286
        %v288 = vsel %vm209, %v262, 0.0
        %v289 = vadd.f32 %v287, %v288
        %v290 = vsel %vm209, %v263, 0.0
        %v291 = vadd.f32 %v289, %v290
        %v292 = vsel %vm209, %v264, 0.0
        %v293 = vadd.f32 %v291, %v292
        %v294 = vsel %vm209, %v265, 0.0
        %v295 = vadd.f32 %v293, %v294
        %v296 = vsel %vm209, %v266, 0.0
        %v297 = vadd.f32 %v295, %v296
        %v298 = vrot.slane %v297, 4
        %v299 = vadd.f32 %v297, %v298
        %v300 = vrot.slane %v299, 2
        %v301 = vadd.f32 %v299, %v300
        %v302 = vrot.slane %v301, 1
        %v303 = vadd.f32 %v301, %v302
        %v304 = vadd.f32 %v250, %v303
        %305 = vst.msk [vmem:[#allocation3] sm:$0x1] %vm248, %v304
        %p306 = scmp.eq.s32.totalorder %s18, 3
        // Predicated region
        $region37: #{tpu_custom_call.1} parent=31 // pred_check
          %p307 = pneg %p306
        $region38: #{tpu_custom_call.1} parent=31 // pred_check_branch
          %309 = sbr.rel (%p307) target = $region40
        $region39: #{tpu_custom_call.1} parent=31 // pred_region
          %v310 = vld [vmem:[#allocation2] sm:$0x1]
          %v311 = vmul.f32 %v310, 0.001953125
          %v312 = vld [vmem:[#allocation3] sm:$0x1]
          %v313 = vmul.f32 %v312, 0.001953125
          %v314 = vmul.f32 %v311, %v311
          %v315 = vsub.f32 %v313, %v314
          %v316 = vld [vmem:[%s1] sm:$0x1]
          %v317 = vadd.f32 %v315, 1e-05
          %v318 = vrsqrt.pop %v317
          %v319 = vmul.f32 %v316, %v318
          %320 = vst.msk [vmem:[#allocation4] sm:$0x1] %vm248, %v319
          %v321 = vld [vmem:[%s2] sm:$0x1]
          %v322 = vmul.f32 %v311, %v319
          %v323 = vsub.f32 %v321, %v322
          %324 = vst.msk [vmem:[#allocation6] sm:$0x1] %vm248, %v323
        $region40: #{tpu_custom_call.1} parent=31 // pred_fallthru
          _
        // Predicated region
        $region41: #{tpu_custom_call.1} parent=31 // pred_check
          %p325 = pneg %p99
        $region42: #{tpu_custom_call.1} parent=31 // pred_check_branch
          %327 = sbr.rel (%p325) target = $region44
        $region43: #{tpu_custom_call.1} parent=31 // pred_region
          %s329 = ssub.s32 16, 16
          %330 = vsyncadd [#allocation5], %s329
          %s332 = sshll.u32 [#allocation4], 4
          %s333 = int_to_ptr.vmem [resolvable:$true] %s332
          %335 = dma.vmem_to_hbm [thread:$0]  %s333, 16, %s3, [#allocation5]
        $region44: #{tpu_custom_call.1} parent=31 // pred_fallthru
          _
        // Predicated region
        $region45: #{tpu_custom_call.1} parent=31 // pred_check
          %p336 = pneg %p120
        $region46: #{tpu_custom_call.1} parent=31 // pred_check_branch
          %338 = sbr.rel (%p336) target = $region48
        $region47: #{tpu_custom_call.1} parent=31 // pred_region
          %s340 = ssub.s32 16, 16
          %341 = vsyncadd [#allocation7], %s340
          %s343 = sshll.u32 [#allocation6], 4
          %s344 = int_to_ptr.vmem [resolvable:$true] %s343
          %346 = dma.vmem_to_hbm [thread:$0]  %s344, 16, %s4, [#allocation7]
        $region48: #{tpu_custom_call.1} parent=31 // pred_fallthru
          _
        // Predicated region
        $region49: #{tpu_custom_call.1} parent=31 // pred_check
          %p347 = pneg %p99
        $region50: #{tpu_custom_call.1} parent=31 // pred_check_branch
          %349 = sbr.rel (%p347) target = $region52
        $region51: #{tpu_custom_call.1} parent=31 // pred_region
          %350 = dma.done [#allocation5], 16
        $region52: #{tpu_custom_call.1} parent=31 // pred_fallthru
          _
        // Predicated region
        $region53: #{tpu_custom_call.1} parent=31 // pred_check
          %p351 = pneg %p120
        $region54: #{tpu_custom_call.1} parent=31 // pred_check_branch
          %353 = sbr.rel (%p351) target = $region56
        $region55: #{tpu_custom_call.1} parent=31 // pred_region
          %354 = dma.done [#allocation7], 16
        $region56: #{tpu_custom_call.1} parent=31 // pred_fallthru
          _
      $region32: #{tpu_custom_call.1} parent=5 // pred_fallthru
        _
      %p355 = scmp.le.s32.totalorder 2, %s13
      // Predicated region
      $region57: #{tpu_custom_call.1} parent=5 // pred_check
        %p356 = pneg %p355
      $region58: #{tpu_custom_call.1} parent=5 // pred_check_branch
        %358 = sbr.rel (%p356) target = $region60
      $region59: #{tpu_custom_call.1} parent=5 // pred_region
        %s359 = ssub.s32 %s13, 2
      $region60: #{tpu_custom_call.1} parent=5 // pred_fallthru
        _
    $region6: #{tpu_custom_call.1} parent=1 // loop_footer
      %s17 = sadd.s32 1, %s13
    $region7: #{tpu_custom_call.1} parent=1 // loop_footer_branch
      %12 = sbr.rel target = $region3
    $region8: #{tpu_custom_call.1} parent=1 // loop_exit
      _
    %360 = vsyncpa [#allocation5], 1
    %s361 = scalar_lea.sflag [#allocation5], 1
    %362 = vsyncpa %s361, 1
    %363 = vsyncpa [#allocation7], 1

</llo_original>
